<compile_context>
chip_gen: v7x
topology: tpu7x:2x2x1
jax: 0.10.0
libtpu: 0.0.40
codegen_flags: <defaults>
</compile_context>

<pallas_src>
import math
import functools

import jax
import jax.numpy as jnp
from jax.experimental import pallas as pl
from jax.experimental.pallas import tpu as pltpu


def _attn_kernel(x_ref, wqkv_ref, bqkv_ref, wproj_ref, bproj_ref,
                 o_ref, acc_ref, *, head_dim):
    # Grid: (batch, head).  Head axis is innermost and "arbitrary": the output block
    # index is constant along it, so acc_ref acts as a resident accumulator.
    h = pl.program_id(1)

    @pl.when(h == 0)
    def _():
        acc_ref[...] = jnp.zeros_like(acc_ref)

    hd = head_dim
    x = x_ref[0].astype(jnp.bfloat16)                               # (T, C)
    T = x.shape[0]

    # Fused per-head q/k/v projection: (T, C) @ (C, 3*hd), bf16 in / f32 accumulate.
    qkv = jnp.dot(x, wqkv_ref[0],
                  preferred_element_type=jnp.float32) + bqkv_ref[0]  # (T, 3*hd) f32
    q = qkv[:, :hd].astype(jnp.bfloat16)
    k = qkv[:, hd:2 * hd].astype(jnp.bfloat16)
    v = qkv[:, 2 * hd:].astype(jnp.bfloat16)

    # Scores: q @ k^T (contract last dims, no explicit transpose), scaled, causal mask.
    att = jax.lax.dot_general(q, k, (((1,), (1,)), ((), ())),
                              preferred_element_type=jnp.float32)    # (T, T) f32
    att = att * (1.0 / math.sqrt(hd))
    row = jax.lax.broadcasted_iota(jnp.int32, (T, T), 0)
    col = jax.lax.broadcasted_iota(jnp.int32, (T, T), 1)
    att = jnp.where(row >= col, att, -1e30)                          # finite fill, no NaN

    # Softmax (EUP exp + approx reciprocal).
    att = att - jnp.max(att, axis=-1, keepdims=True)
    p = jnp.exp(att)
    p = p * pl.reciprocal(jnp.sum(p, axis=-1, keepdims=True), approx=True)

    # Per-head attention output, then partial output projection accumulated in f32.
    y_h = jnp.dot(p.astype(jnp.bfloat16), v,
                  preferred_element_type=jnp.float32)                # (T, hd)
    acc_ref[...] += jnp.dot(y_h.astype(jnp.bfloat16), wproj_ref[0],
                            preferred_element_type=jnp.float32)      # (T, C)

    @pl.when(h == pl.num_programs(1) - 1)
    def _():
        # Lane-dense (T, C) store of the finished batch element.
        o_ref[0] = (acc_ref[...] + bproj_ref[...]).astype(o_ref.dtype)


def causal_self_attention(x, params, n_head):
    """x: (B, T, C) float32. params: PyTorch-layout weights (out,in) and biases (C,)."""
    B, T, C = x.shape
    hd = C // n_head

    # ---- plain-JAX glue: PyTorch (out,in) weights -> head-stacked (in,out), bf16 ----
    def per_head(w):  # (C_out, C_in) -> (n_head, C_in, hd): head-sliced columns of w.T
        return jnp.transpose(w.T.reshape(C, n_head, hd), (1, 0, 2))

    w_qkv = jnp.concatenate([per_head(params["wq"]),
                             per_head(params["wk"]),
                             per_head(params["wv"])],
                            axis=2).astype(jnp.bfloat16)             # (H, C, 3*hd)
    b_qkv = jnp.concatenate([params["bq"].reshape(n_head, 1, hd),
                             params["bk"].reshape(n_head, 1, hd),
                             params["bv"].reshape(n_head, 1, hd)],
                            axis=2).astype(jnp.float32)              # (H, 1, 3*hd)
    w_proj = params["wp"].T.reshape(n_head, hd, C).astype(jnp.bfloat16)  # (H, hd, C)
    b_proj = params["bp"].reshape(1, C).astype(jnp.float32)          # (1, C)

    kernel = functools.partial(_attn_kernel, head_dim=hd)

    return pl.pallas_call(
        kernel,
        out_shape=jax.ShapeDtypeStruct((B, T, C), x.dtype),
        grid_spec=pltpu.PrefetchScalarGridSpec(
            num_scalar_prefetch=0,
            grid=(B, n_head),
            in_specs=[
                pl.BlockSpec((1, T, C), lambda b, h: (b, 0, 0)),        # x
                pl.BlockSpec((1, C, 3 * hd), lambda b, h: (h, 0, 0)),   # fused qkv W (bf16)
                pl.BlockSpec((1, 1, 3 * hd), lambda b, h: (h, 0, 0)),   # fused qkv bias
                pl.BlockSpec((1, hd, C), lambda b, h: (h, 0, 0)),       # proj W rows (bf16)
                pl.BlockSpec((1, C), lambda b, h: (0, 0)),              # proj bias
            ],
            out_specs=pl.BlockSpec((1, T, C), lambda b, h: (b, 0, 0)),
            scratch_shapes=[pltpu.VMEM((T, C), jnp.float32)],           # f32 accumulator
        ),
        compiler_params=pltpu.CompilerParams(
            dimension_semantics=("parallel", "arbitrary")),
    )(x, w_qkv, b_qkv, w_proj, b_proj)


def _reference(x, params, n_head):
    """Pure-JAX f32 reference mirroring the PyTorch forward (eval mode)."""
    B, T, C = x.shape
    hd = C // n_head

    def lin(x, w, b):  # nn.Linear: x @ W^T + b
        return x @ w.T + b

    q = lin(x, params["wq"], params["bq"]).reshape(B, T, n_head, hd).transpose(0, 2, 1, 3)
    k = lin(x, params["wk"], params["bk"]).reshape(B, T, n_head, hd).transpose(0, 2, 1, 3)
    v = lin(x, params["wv"], params["bv"]).reshape(B, T, n_head, hd).transpose(0, 2, 1, 3)
    att = jnp.einsum("bhtd,bhsd->bhts", q, k) * (1.0 / math.sqrt(hd))
    mask = jnp.tril(jnp.ones((T, T), dtype=bool))
    att = jnp.where(mask[None, None], att, -jnp.inf)
    att = jax.nn.softmax(att, axis=-1)
    y = jnp.einsum("bhts,bhsd->bhtd", att, v).transpose(0, 2, 1, 3).reshape(B, T, C)
    return lin(y, params["wp"], params["bp"])


if __name__ == "__main__":
    B, T, C = 2, 8, 32        # block_size = T = 8
    n_head = 4

    key = jax.random.PRNGKey(0)
    keys = jax.random.split(key, 9)
    bound = 1.0 / math.sqrt(C)   # PyTorch nn.Linear default init scale
    params = {
        "wq": jax.random.uniform(keys[0], (C, C), jnp.float32, -bound, bound),
        "bq": jax.random.uniform(keys[1], (C,), jnp.float32, -bound, bound),
        "wk": jax.random.uniform(keys[2], (C, C), jnp.float32, -bound, bound),
        "bk": jax.random.uniform(keys[3], (C,), jnp.float32, -bound, bound),
        "wv": jax.random.uniform(keys[4], (C, C), jnp.float32, -bound, bound),
        "bv": jax.random.uniform(keys[5], (C,), jnp.float32, -bound, bound),
        "wp": jax.random.uniform(keys[6], (C, C), jnp.float32, -bound, bound),
        "bp": jax.random.uniform(keys[7], (C,), jnp.float32, -bound, bound),
    }
    x = jax.random.normal(keys[8], (B, T, C), jnp.float32)

    out = jax.block_until_ready(causal_self_attention(x, params, n_head))
    ref = _reference(x, params, n_head)

    assert out.shape == (B, T, C)
    # bf16 matmul inputs with f32 accumulation -> looser tolerance vs f32 reference.
    assert jnp.allclose(out, ref, rtol=2e-2, atol=2e-2), "mismatch vs reference"

    print("KERNEL_OK")
</pallas_src>

<mosaic_0001>
module attributes {stable_mosaic.version = 11 : i64} {
  func.func @_attn_kernel(%arg0: i32, %arg1: i32, %arg2: memref<1x8x32xf32, #tpu.memory_space<vmem>>, %arg3: memref<1x32x24xbf16, #tpu.memory_space<vmem>>, %arg4: memref<1x1x24xf32, #tpu.memory_space<vmem>>, %arg5: memref<1x8x32xbf16, #tpu.memory_space<vmem>>, %arg6: memref<1x32xf32, #tpu.memory_space<vmem>>, %arg7: memref<1x8x32xf32, #tpu.memory_space<vmem>>, %arg8: memref<8x32xf32, #tpu.memory_space<vmem>>) attributes {dimension_semantics = [#tpu.dimension_semantics<parallel>, #tpu.dimension_semantics<arbitrary>], iteration_bounds = array<i64: 2, 4>, scalar_prefetch = 0 : i64, scratch_operands = 1 : i64, tpu.core_type = #tpu.core_type<tc>, window_params = [{transform_indices = @transform_0, window_bounds = array<i64: 1, 8, 32>}, {transform_indices = @transform_1, window_bounds = array<i64: 1, 32, 24>}, {transform_indices = @transform_2, window_bounds = array<i64: 1, 1, 24>}, {transform_indices = @transform_3, window_bounds = array<i64: 1, 8, 32>}, {pipeline_mode = #tpu.pipeline_mode<synchronous>, transform_indices = @transform_4, window_bounds = array<i64: 1, 32>}, {transform_indices = @transform_5, window_bounds = array<i64: 1, 8, 32>}]} {
    %c0_i32 = arith.constant 0 : i32
    %0 = arith.cmpi eq, %arg1, %c0_i32 : i32
    %1 = arith.extui %0 : i1 to i32
    %c0_i32_0 = arith.constant 0 : i32
    %2 = arith.cmpi ne, %1, %c0_i32_0 : i32
    scf.if %2 {
      %cst_24 = arith.constant 0.000000e+00 : f32
      %49 = vector.broadcast %cst_24 : f32 to vector<8x32xf32>
      %c0_25 = arith.constant 0 : index
      %c0_26 = arith.constant 0 : index
      %50 = vector.load %arg8[%c0_25, %c0_26] : memref<8x32xf32, #tpu.memory_space<vmem>>, vector<8x32xf32>
      tpu.vector_store %arg8[%c0_25, %c0_26], %49 {strides = array<i32>} : memref<8x32xf32, #tpu.memory_space<vmem>>, vector<8x32xf32>,
    } else {
    }
    %c0 = arith.constant 0 : index
    %c0_1 = arith.constant 0 : index
    %c0_2 = arith.constant 0 : index
    %3 = vector.load %arg2[%c0, %c0_1, %c0_2] : memref<1x8x32xf32, #tpu.memory_space<vmem>>, vector<1x8x32xf32>
    %4 = vector.shape_cast %3 : vector<1x8x32xf32> to vector<8x32xf32>
    %5 = arith.truncf %4 : vector<8x32xf32> to vector<8x32xbf16>
    %c0_3 = arith.constant 0 : index
    %c0_4 = arith.constant 0 : index
    %c0_5 = arith.constant 0 : index
    %6 = vector.load %arg3[%c0_3, %c0_4, %c0_5] : memref<1x32x24xbf16, #tpu.memory_space<vmem>>, vector<1x32x24xbf16>
    %7 = vector.shape_cast %6 : vector<1x32x24xbf16> to vector<32x24xbf16>
    %cst = arith.constant dense<0.000000e+00> : vector<8x24xf32>
    %8 = tpu.matmul %5, %7, %cst {dimension_numbers = #tpu.dot_dimension_numbers<[1], [0], [0], [1], [0, 0, 1, 1], [], []>} : vector<8x32xbf16>, vector<32x24xbf16>, vector<8x24xf32> -> vector<8x24xf32>
    %c0_6 = arith.constant 0 : index
    %c0_7 = arith.constant 0 : index
    %c0_8 = arith.constant 0 : index
    %9 = vector.load %arg4[%c0_6, %c0_7, %c0_8] : memref<1x1x24xf32, #tpu.memory_space<vmem>>, vector<1x1x24xf32>
    %10 = vector.shape_cast %9 : vector<1x1x24xf32> to vector<1x24xf32>
    %11 = vector.broadcast %10 : vector<1x24xf32> to vector<8x24xf32>
    %12 = arith.addf %8, %11 : vector<8x24xf32>
    %13 = vector.extract_strided_slice %12 {offsets = [0, 0], sizes = [8, 8], strides = [1, 1]} : vector<8x24xf32> to vector<8x8xf32>
    %14 = arith.truncf %13 : vector<8x8xf32> to vector<8x8xbf16>
    %15 = vector.extract_strided_slice %12 {offsets = [0, 8], sizes = [8, 8], strides = [1, 1]} : vector<8x24xf32> to vector<8x8xf32>
    %16 = arith.truncf %15 : vector<8x8xf32> to vector<8x8xbf16>
    %17 = vector.extract_strided_slice %12 {offsets = [0, 16], sizes = [8, 8], strides = [1, 1]} : vector<8x24xf32> to vector<8x8xf32>
    %18 = arith.truncf %17 : vector<8x8xf32> to vector<8x8xbf16>
    %cst_9 = arith.constant dense<0.000000e+00> : vector<8x8xf32>
    %19 = tpu.matmul %14, %16, %cst_9 {dimension_numbers = #tpu.dot_dimension_numbers<[1], [1], [0], [0], [0, 0, 1, 0], [], []>} : vector<8x8xbf16>, vector<8x8xbf16>, vector<8x8xf32> -> vector<8x8xf32>
    %cst_10 = arith.constant 0.353553385 : f32
    %20 = vector.broadcast %cst_10 : f32 to vector<8x8xf32>
    %21 = arith.mulf %19, %20 : vector<8x8xf32>
    %22 = tpu.iota {dimensions = array<i32: 0>} : vector<8x8xi32>
    %23 = tpu.iota {dimensions = array<i32: 1>} : vector<8x8xi32>
    %24 = arith.cmpi sge, %22, %23 : vector<8x8xi32>
    %cst_11 = arith.constant -1.000000e+30 : f32
    %25 = vector.broadcast %cst_11 : f32 to vector<8x8xf32>
    %26 = arith.select %24, %21, %25 : vector<8x8xi1>, vector<8x8xf32>
    %cst_12 = arith.constant dense<0xFF800000> : vector<8xf32>
    %27 = vector.multi_reduction <maximumf>, %26, %cst_12 [1] : vector<8x8xf32> to vector<8xf32>
    %28 = vector.shape_cast %27 : vector<8xf32> to vector<8x1xf32>
    %29 = vector.broadcast %28 : vector<8x1xf32> to vector<8x8xf32>
    %30 = arith.subf %26, %29 : vector<8x8xf32>
    %31 = math.exp %30 : vector<8x8xf32>
    %cst_13 = arith.constant dense<0.000000e+00> : vector<8xf32>
    %32 = vector.multi_reduction <add>, %31, %cst_13 [1] : vector<8x8xf32> to vector<8xf32>
    %33 = vector.shape_cast %32 : vector<8xf32> to vector<8x1xf32>
    %34 = tpu.reciprocal %33 {approx = true} : vector<8x1xf32> -> vector<8x1xf32>
    %35 = vector.broadcast %34 : vector<8x1xf32> to vector<8x8xf32>
    %36 = arith.mulf %31, %35 : vector<8x8xf32>
    %37 = arith.truncf %36 : vector<8x8xf32> to vector<8x8xbf16>
    %cst_14 = arith.constant dense<0.000000e+00> : vector<8x8xf32>
    %38 = tpu.matmul %37, %18, %cst_14 {dimension_numbers = #tpu.dot_dimension_numbers<[1], [0], [0], [1], [0, 0, 1, 1], [], []>} : vector<8x8xbf16>, vector<8x8xbf16>, vector<8x8xf32> -> vector<8x8xf32>
    %c0_15 = arith.constant 0 : index
    %c0_16 = arith.constant 0 : index
    %39 = vector.load %arg8[%c0_15, %c0_16] : memref<8x32xf32, #tpu.memory_space<vmem>>, vector<8x32xf32>
    %40 = arith.truncf %38 : vector<8x8xf32> to vector<8x8xbf16>
    %c0_17 = arith.constant 0 : index
    %c0_18 = arith.constant 0 : index
    %c0_19 = arith.constant 0 : index
    %41 = vector.load %arg5[%c0_17, %c0_18, %c0_19] : memref<1x8x32xbf16, #tpu.memory_space<vmem>>, vector<1x8x32xbf16>
    %42 = vector.shape_cast %41 : vector<1x8x32xbf16> to vector<8x32xbf16>
    %cst_20 = arith.constant dense<0.000000e+00> : vector<8x32xf32>
    %43 = tpu.matmul %40, %42, %cst_20 {dimension_numbers = #tpu.dot_dimension_numbers<[1], [0], [0], [1], [0, 0, 1, 1], [], []>} : vector<8x8xbf16>, vector<8x32xbf16>, vector<8x32xf32> -> vector<8x32xf32>
    %44 = arith.addf %39, %43 : vector<8x32xf32>
    %c0_21 = arith.constant 0 : index
    %c0_22 = arith.constant 0 : index
    %45 = vector.load %arg8[%c0_21, %c0_22] : memref<8x32xf32, #tpu.memory_space<vmem>>, vector<8x32xf32>
    tpu.vector_store %arg8[%c0_21, %c0_22], %44 {strides = array<i32>} : memref<8x32xf32, #tpu.memory_space<vmem>>, vector<8x32xf32>,
    %c3_i32 = arith.constant 3 : i32
    %46 = arith.cmpi eq, %arg1, %c3_i32 : i32
    %47 = arith.extui %46 : i1 to i32
    %c0_i32_23 = arith.constant 0 : i32
    %48 = arith.cmpi ne, %47, %c0_i32_23 : i32
    scf.if %48 {
      %c0_24 = arith.constant 0 : index
      %c0_25 = arith.constant 0 : index
      %49 = vector.load %arg8[%c0_24, %c0_25] : memref<8x32xf32, #tpu.memory_space<vmem>>, vector<8x32xf32>
      %c0_26 = arith.constant 0 : index
      %c0_27 = arith.constant 0 : index
      %50 = vector.load %arg6[%c0_26, %c0_27] : memref<1x32xf32, #tpu.memory_space<vmem>>, vector<1x32xf32>
      %51 = vector.broadcast %50 : vector<1x32xf32> to vector<8x32xf32>
      %52 = arith.addf %49, %51 : vector<8x32xf32>
      %c0_28 = arith.constant 0 : index
      %c0_29 = arith.constant 0 : index
      %c0_30 = arith.constant 0 : index
      %53 = vector.load %arg7[%c0_28, %c0_29, %c0_30] : memref<1x8x32xf32, #tpu.memory_space<vmem>>, vector<1x8x32xf32>
      %54 = vector.shape_cast %53 : vector<1x8x32xf32> to vector<8x32xf32>
      %55 = vector.shape_cast %52 : vector<8x32xf32> to vector<1x8x32xf32>
      tpu.vector_store %arg7[%c0_28, %c0_29, %c0_30], %55 {strides = array<i32>} : memref<1x8x32xf32, #tpu.memory_space<vmem>>, vector<1x8x32xf32>,
    } else {
    }
    return
  }
  func.func @transform_0(%arg0: i32, %arg1: i32) -> (i32, i32, i32) {
    %c0_i32 = arith.constant 0 : i32
    %c0_i32_0 = arith.constant 0 : i32
    %c0_i32_1 = arith.constant 0 : i32
    return %arg0, %c0_i32, %c0_i32_0 : i32, i32, i32
  }
  func.func @transform_1(%arg0: i32, %arg1: i32) -> (i32, i32, i32) {
    %c0_i32 = arith.constant 0 : i32
    %c0_i32_0 = arith.constant 0 : i32
    %c0_i32_1 = arith.constant 0 : i32
    return %arg1, %c0_i32, %c0_i32_0 : i32, i32, i32
  }
  func.func @transform_2(%arg0: i32, %arg1: i32) -> (i32, i32, i32) {
    %c0_i32 = arith.constant 0 : i32
    %c0_i32_0 = arith.constant 0 : i32
    %c0_i32_1 = arith.constant 0 : i32
    return %arg1, %c0_i32, %c0_i32_0 : i32, i32, i32
  }
  func.func @transform_3(%arg0: i32, %arg1: i32) -> (i32, i32, i32) {
    %c0_i32 = arith.constant 0 : i32
    %c0_i32_0 = arith.constant 0 : i32
    %c0_i32_1 = arith.constant 0 : i32
    return %arg1, %c0_i32, %c0_i32_0 : i32, i32, i32
  }
  func.func @transform_4(%arg0: i32, %arg1: i32) -> (i32, i32) {
    %c0_i32 = arith.constant 0 : i32
    %c0_i32_0 = arith.constant 0 : i32
    %c0_i32_1 = arith.constant 0 : i32
    return %c0_i32, %c0_i32_0 : i32, i32
  }
  func.func @transform_5(%arg0: i32, %arg1: i32) -> (i32, i32, i32) {
    %c0_i32 = arith.constant 0 : i32
    %c0_i32_0 = arith.constant 0 : i32
    %c0_i32_1 = arith.constant 0 : i32
    return %arg0, %c0_i32, %c0_i32_0 : i32, i32, i32
  }
}

</mosaic_0001>

<llo_original>
// kernel: tpu_custom_call.1
$region0: #{tpu_custom_call.1}
  #allocation0 [shape = 'u32[]', space=smem, size = 0x4, offset = 0x4, fixed_abs, tag = 'smem constant byte address 0x4 - core index']
  #allocation1 [shape = 'u32[144,128]{1,0:T(1,128)}', space=vmem, size = 0x12000, scoped, tag = 'internal scratch']
  #allocation2 [shape = 'f32[8,32]{1,0:T(8,128)}', space=vmem, size = 0x1000, scoped, tag = 'scratch operand']
  %s0 = inlined_call_operand.vmem [shape: f32[2,8,32], index: 0, kind: input, shape index: {}]
  %s1 = inlined_call_operand.vmem [shape: bf16[4,32,24], index: 1, kind: input, shape index: {}]
  %s2 = inlined_call_operand.vmem [shape: f32[4,1,24], index: 2, kind: input, shape index: {}]
  %s3 = inlined_call_operand.vmem [shape: bf16[4,8,32], index: 3, kind: input, shape index: {}]
  %s4 = inlined_call_operand.vmem [shape: f32[1,32], index: 4, kind: input, shape index: {}]
  %s5 = inlined_call_operand.hbm [shape: f32[2,8,32], index: 5, kind: output, shape index: {}]
  %s6 = sld [smem:[#allocation0]]
  $region61: #{tpu_custom_call.1} parent=0
    _
  %s8 = ssub.s32 1, %s6
  %s9 = scalar_select 0, %s8, %s6
  $region1: #{tpu_custom_call.1} parent=0
    #allocation3 [shape = 'u8[8192]{0}', space=vmem, size = 0x2000, scoped, tag = 'output window, operand 0']
    #allocation4 [shape = 's32[2]{0}', space=sflag, size = 0x8, scoped, tag = 'scoped memory for tpu_custom_call.1']
    %10 = vsyncpa [#allocation4], 0
    %s11 = scalar_lea.sflag [#allocation4], 1
    %12 = vsyncpa %s11, 0
    loop: start=0, step=1, limit=10
    $region2: #{tpu_custom_call.1} parent=1 // loop_pre_header
      _
    $region3: #{tpu_custom_call.1} parent=1 // loop_header
      %s14 = sphi 0, %s18
      %p15 = scmp.ge.s32.totalorder %s14, 10
      %s21 = sphi 0, %s33
      %s22 = sphi 0, %s29
      %s23 = sphi 0, %s21
      %s24 = sphi 0, %s22
      %s25 = sphi 0, %s23
      %s26 = sphi 0, %s24
      %s36 = sphi 0, %s38
      %s39 = sphi 0, %s36
      %s40 = sphi 0, %s39
      %s56 = sphi 0, %s40
      %s62 = sphi 0, %s64
      %s65 = sphi 0, %s62
      %s66 = sphi 0, %s65
      %s82 = sphi 0, %s66
      %s88 = sphi 0, %s90
      %s91 = sphi 0, %s88
      %s92 = sphi 0, %s91
      %s108 = sphi 0, %s92
      %s114 = sphi 0, %s116
      %s117 = sphi 0, %s114
      %s118 = sphi 0, %s117
      %s134 = sphi 0, %s118
      %s138 = sphi 0, %s138
      %s140 = sphi 0, %s138
      %s141 = sphi 0, %s140
      %s155 = sphi 0, %s141
      %s161 = sphi 0, %s163
      %s164 = sphi 0, %s161
      %s165 = sphi 0, %s164
      %s181 = sphi 0, %s165
    $region4: #{tpu_custom_call.1} parent=1 // loop_header_branch
      %17 = sbr.rel (%p15) target = $region8
    $region5: #{tpu_custom_call.1} parent=1 // loop_body
      %s19 = ssub.s32 %s14, 1
      %s20 = ssub.s32 %s14, 2
      %s27 = sadd.s32 1, %s22
      %p28 = scmp.ge.s32.totalorder %s27, 4
      %s29 = scalar_select %p28, 0, %s27
      %s30 = sadd.s32 1, %s21
      %s31 = scalar_select %p28, %s30, %s21
      %p32 = scmp.ge.s32.totalorder %s31, 2
      %s33 = scalar_select %p32, 0, %s31
      %s34 = ssub.s32 %s21, %s33
      %p35 = scmp.eq.s32.totalorder %s34, 0
      %s37 = sadd.s32 %s36, 1
      %s38 = scalar_select %p35, %s36, %s37
      %p41 = pneg %p35
      %p42 = scmp.eq.s32.totalorder %s14, 7
      %p43 = por %p41, %p42
      %p44 = scmp.ne.s32.totalorder %s36, %s39
      %p45 = scmp.eq.s32.totalorder %s14, 0
      %p46 = por %p44, %p45
      %p47 = scmp.ne.s32.totalorder %s36, %s39
      %p48 = scmp.eq.s32.totalorder %s19, 7
      %p49 = por %p47, %p48
      %p50 = scmp.ne.s32.totalorder %s39, %s40
      %p51 = scmp.eq.s32.totalorder %s19, 0
      %p52 = por %p50, %p51
      %p53 = scmp.ne.s32.totalorder %s39, %s40
      %p54 = scmp.eq.s32.totalorder %s20, 7
      %p55 = por %p53, %p54
      %p57 = scmp.ne.s32.totalorder %s40, %s56
      %p58 = scmp.eq.s32.totalorder %s20, 0
      %p59 = por %p57, %p58
      %s60 = ssub.s32 %s22, %s29
      %p61 = scmp.eq.s32.totalorder %s60, 0
      %s63 = sadd.s32 %s62, 1
      %s64 = scalar_select %p61, %s62, %s63
      %p67 = pneg %p61
      %p68 = scmp.eq.s32.totalorder %s14, 7
      %p69 = por %p67, %p68
      %p70 = scmp.ne.s32.totalorder %s62, %s65
      %p71 = scmp.eq.s32.totalorder %s14, 0
      %p72 = por %p70, %p71
      %p73 = scmp.ne.s32.totalorder %s62, %s65
      %p74 = scmp.eq.s32.totalorder %s19, 7
      %p75 = por %p73, %p74
      %p76 = scmp.ne.s32.totalorder %s65, %s66
      %p77 = scmp.eq.s32.totalorder %s19, 0
      %p78 = por %p76, %p77
      %p79 = scmp.ne.s32.totalorder %s65, %s66
      %p80 = scmp.eq.s32.totalorder %s20, 7
      %p81 = por %p79, %p80
      %p83 = scmp.ne.s32.totalorder %s66, %s82
      %p84 = scmp.eq.s32.totalorder %s20, 0
      %p85 = por %p83, %p84
      %s86 = ssub.s32 %s22, %s29
      %p87 = scmp.eq.s32.totalorder %s86, 0
      %s89 = sadd.s32 %s88, 1
      %s90 = scalar_select %p87, %s88, %s89
      %p93 = pneg %p87
      %p94 = scmp.eq.s32.totalorder %s14, 7
      %p95 = por %p93, %p94
      %p96 = scmp.ne.s32.totalorder %s88, %s91
      %p97 = scmp.eq.s32.totalorder %s14, 0
      %p98 = por %p96, %p97
      %p99 = scmp.ne.s32.totalorder %s88, %s91
      %p100 = scmp.eq.s32.totalorder %s19, 7
      %p101 = por %p99, %p100
      %p102 = scmp.ne.s32.totalorder %s91, %s92
      %p103 = scmp.eq.s32.totalorder %s19, 0
      %p104 = por %p102, %p103
      %p105 = scmp.ne.s32.totalorder %s91, %s92
      %p106 = scmp.eq.s32.totalorder %s20, 7
      %p107 = por %p105, %p106
      %p109 = scmp.ne.s32.totalorder %s92, %s108
      %p110 = scmp.eq.s32.totalorder %s20, 0
      %p111 = por %p109, %p110
      %s112 = ssub.s32 %s22, %s29
      %p113 = scmp.eq.s32.totalorder %s112, 0
      %s115 = sadd.s32 %s114, 1
      %s116 = scalar_select %p113, %s114, %s115
      %p119 = pneg %p113
      %p120 = scmp.eq.s32.totalorder %s14, 7
      %p121 = por %p119, %p120
      %p122 = scmp.ne.s32.totalorder %s114, %s117
      %p123 = scmp.eq.s32.totalorder %s14, 0
      %p124 = por %p122, %p123
      %p125 = scmp.ne.s32.totalorder %s114, %s117
      %p126 = scmp.eq.s32.totalorder %s19, 7
      %p127 = por %p125, %p126
      %p128 = scmp.ne.s32.totalorder %s117, %s118
      %p129 = scmp.eq.s32.totalorder %s19, 0
      %p130 = por %p128, %p129
      %p131 = scmp.ne.s32.totalorder %s117, %s118
      %p132 = scmp.eq.s32.totalorder %s20, 7
      %p133 = por %p131, %p132
      %p135 = scmp.ne.s32.totalorder %s118, %s134
      %p136 = scmp.eq.s32.totalorder %s20, 0
      %p137 = por %p135, %p136
      %s139 = sadd.s32 %s138, 1
      %p142 = scmp.eq.s32.totalorder %s14, 7
      %p143 = scmp.ne.s32.totalorder %s138, %s140
      %p144 = scmp.eq.s32.totalorder %s14, 0
      %p145 = por %p143, %p144
      %p146 = scmp.ne.s32.totalorder %s138, %s140
      %p147 = scmp.eq.s32.totalorder %s19, 7
      %p148 = por %p146, %p147
      %p149 = scmp.ne.s32.totalorder %s140, %s141
      %p150 = scmp.eq.s32.totalorder %s19, 0
      %p151 = por %p149, %p150
      %p152 = scmp.ne.s32.totalorder %s140, %s141
      %p153 = scmp.eq.s32.totalorder %s20, 7
      %p154 = por %p152, %p153
      %p156 = scmp.ne.s32.totalorder %s141, %s155
      %p157 = scmp.eq.s32.totalorder %s20, 0
      %p158 = por %p156, %p157
      %s159 = ssub.s32 %s21, %s33
      %p160 = scmp.eq.s32.totalorder %s159, 0
      %s162 = sadd.s32 %s161, 1
      %s163 = scalar_select %p160, %s161, %s162
      %p166 = pneg %p160
      %p167 = scmp.eq.s32.totalorder %s14, 7
      %p168 = por %p166, %p167
      %p169 = scmp.ne.s32.totalorder %s161, %s164
      %p170 = scmp.eq.s32.totalorder %s14, 0
      %p171 = por %p169, %p170
      %p172 = scmp.ne.s32.totalorder %s161, %s164
      %p173 = scmp.eq.s32.totalorder %s19, 7
      %p174 = por %p172, %p173
      %p175 = scmp.ne.s32.totalorder %s164, %s165
      %p176 = scmp.eq.s32.totalorder %s19, 0
      %p177 = por %p175, %p176
      %p178 = scmp.ne.s32.totalorder %s164, %s165
      %p179 = scmp.eq.s32.totalorder %s20, 7
      %p180 = por %p178, %p179
      %p182 = scmp.ne.s32.totalorder %s165, %s181
      %p183 = scmp.eq.s32.totalorder %s20, 0
      %p184 = por %p182, %p183
      %p185 = scmp.le.s32.totalorder 1, %s14
      %p186 = scmp.lt.s32.totalorder %s14, 9
      %p187 = pnand %p185, %p186
      %p188 = pneg %p187
      // Predicated region
      $region9: #{tpu_custom_call.1} parent=5 // pred_check
        _
      $region10: #{tpu_custom_call.1} parent=5 // pred_check_branch
        %190 = sbr.rel (%p187) target = $region12
      $region11: #{tpu_custom_call.1} parent=5 // pred_region
        %s191 = ssub.s32 %s14, 1
        // Predicated region
        $region13: #{tpu_custom_call.1} parent=11 // pred_check
          %p192 = pneg %p151
        $region14: #{tpu_custom_call.1} parent=11 // pred_check_branch
          %194 = sbr.rel (%p192) target = $region16
        $region15: #{tpu_custom_call.1} parent=11 // pred_region
          _
        $region16: #{tpu_custom_call.1} parent=11 // pred_fallthru
          _
      $region12: #{tpu_custom_call.1} parent=5 // pred_fallthru
        _
      %p195 = scmp.lt.s32.totalorder %s14, 8
      // Predicated region
      $region17: #{tpu_custom_call.1} parent=5 // pred_check
        %p196 = pneg %p195
      $region18: #{tpu_custom_call.1} parent=5 // pred_check_branch
        %198 = sbr.rel (%p196) target = $region20
      $region19: #{tpu_custom_call.1} parent=5 // pred_region
        // Predicated region
        $region21: #{tpu_custom_call.1} parent=19 // pred_check
          %p199 = pneg %p46
        $region22: #{tpu_custom_call.1} parent=19 // pred_check_branch
          %201 = sbr.rel (%p199) target = $region24
        $region23: #{tpu_custom_call.1} parent=19 // pred_region
          %p202 = scmp.lt.s32.totalorder %s21, 1
          %s203 = scalar_select %p202, %s21, 1
          %s204 = smul.addr %s203, 8
          %s205 = scalar_lea.vmem %s0, %s204
        $region24: #{tpu_custom_call.1} parent=19 // pred_fallthru
          _
        // Predicated region
        $region25: #{tpu_custom_call.1} parent=19 // pred_check
          %p206 = pneg %p72
        $region26: #{tpu_custom_call.1} parent=19 // pred_check_branch
          %208 = sbr.rel (%p206) target = $region28
        $region27: #{tpu_custom_call.1} parent=19 // pred_region
          %p209 = scmp.lt.s32.totalorder %s22, 3
          %s210 = scalar_select %p209, %s22, 3
          %s211 = smul.addr %s210, 4
          %s212 = smul.addr %s211, 4
          %s213 = scalar_lea.vmem %s1, %s212
        $region28: #{tpu_custom_call.1} parent=19 // pred_fallthru
          _
        // Predicated region
        $region29: #{tpu_custom_call.1} parent=19 // pred_check
          %p214 = pneg %p98
        $region30: #{tpu_custom_call.1} parent=19 // pred_check_branch
          %216 = sbr.rel (%p214) target = $region32
        $region31: #{tpu_custom_call.1} parent=19 // pred_region
          %p217 = scmp.lt.s32.totalorder %s22, 3
          %s218 = scalar_select %p217, %s22, 3
          %s219 = scalar_lea.vmem %s2, %s218
        $region32: #{tpu_custom_call.1} parent=19 // pred_fallthru
          _
        // Predicated region
        $region33: #{tpu_custom_call.1} parent=19 // pred_check
          %p220 = pneg %p124
        $region34: #{tpu_custom_call.1} parent=19 // pred_check_branch
          %222 = sbr.rel (%p220) target = $region36
        $region35: #{tpu_custom_call.1} parent=19 // pred_region
          %p223 = scmp.lt.s32.totalorder %s22, 3
          %s224 = scalar_select %p223, %s22, 3
          %s225 = smul.addr %s224, 4
          %s226 = scalar_lea.vmem %s3, %s225
        $region36: #{tpu_custom_call.1} parent=19 // pred_fallthru
          _
      $region20: #{tpu_custom_call.1} parent=5 // pred_fallthru
        _
      %p227 = scmp.le.s32.totalorder 1, %s14
      %p228 = scmp.lt.s32.totalorder %s14, 9
      %p229 = pnand %p227, %p228
      %p230 = pneg %p229
      // Predicated region
      $region37: #{tpu_custom_call.1} parent=5 // pred_check
        _
      $region38: #{tpu_custom_call.1} parent=5 // pred_check_branch
        %232 = sbr.rel (%p229) target = $region40
      $region39: #{tpu_custom_call.1} parent=5 // pred_region
        %s233 = ssub.s32 %s14, 1
        %p234 = scmp.lt.s32.totalorder %s23, 1
        %s235 = scalar_select %p234, %s23, 1
        %s236 = smul.addr %s235, 8
        %s237 = scalar_lea.vmem %s0, %s236
        %p238 = pneg %p52
        %p239 = pneg %p49
        %p240 = scmp.lt.s32.totalorder %s24, 3
        %s241 = scalar_select %p240, %s24, 3
        %s242 = smul.addr %s241, 4
        %s243 = smul.addr %s242, 4
        %s244 = scalar_lea.vmem %s1, %s243
        %p245 = pneg %p78
        %p246 = pneg %p75
        %p247 = scmp.lt.s32.totalorder %s24, 3
        %s248 = scalar_select %p247, %s24, 3
        %s249 = scalar_lea.vmem %s2, %s248
        %p250 = pneg %p104
        %p251 = pneg %p101
        %p252 = scmp.lt.s32.totalorder %s24, 3
        %s253 = scalar_select %p252, %s24, 3
        %s254 = smul.addr %s253, 4
        %s255 = scalar_lea.vmem %s3, %s254
        %p256 = pneg %p130
        %p257 = pneg %p127
        %p258 = pneg %p151
        %p259 = pneg %p148
        %p260 = pneg %p177
        %p261 = pneg %p174
        %s262 = sand.u32 %s164, 1
        %s263 = scalar_lea.sflag [#allocation4], %s262
        %s264 = sand.u32 %s164, 1
        %s265 = smul.addr %s264, 8
        %s266 = scalar_lea.vmem [#allocation3], %s265
        %p267 = scmp.lt.s32.totalorder %s23, 1
        %s268 = scalar_select %p267, %s23, 1
        %s269 = smul.addr %s268, 8
        %s270 = scalar_lea.vmem %s0, %s269
        %p271 = scmp.lt.s32.totalorder %s24, 3
        %s272 = scalar_select %p271, %s24, 3
        %s273 = smul.addr %s272, 4
        %s274 = smul.addr %s273, 4
        %s275 = scalar_lea.vmem %s1, %s274
        %p276 = scmp.lt.s32.totalorder %s24, 3
        %s277 = scalar_select %p276, %s24, 3
        %s278 = scalar_lea.vmem %s2, %s277
        %p279 = scmp.lt.s32.totalorder %s24, 3
        %s280 = scalar_select %p279, %s24, 3
        %s281 = smul.addr %s280, 4
        %s282 = scalar_lea.vmem %s3, %s281
        %p284 = scmp.eq.s32.totalorder %s24, 0
        // Predicated region
        $region41: #{tpu_custom_call.1} parent=39 // pred_check
          %p285 = pneg %p284
        $region42: #{tpu_custom_call.1} parent=39 // pred_check_branch
          %287 = sbr.rel (%p285) target = $region44
        $region43: #{tpu_custom_call.1} parent=39 // pred_region
          %vm288 = vcmask 261120
          %289 = vst.msk [vmem:[#allocation2] sm:$0xff] %vm288, 0.0
        $region44: #{tpu_custom_call.1} parent=39 // pred_fallthru
          _
        %v290 = vld [vmem:[%s270] sm:$0xff]
        %v291 = vpack.c.bf16 %v290, %v290
        %v292 = vld [vmem:[%s275] sm:$0xf]
        %v293 = vld [vmem:[%s275 + $0x4] sm:$0xf]
        %v294 = vld [vmem:[%s275 + $0x8] sm:$0xf]
        %v295 = vld [vmem:[%s275 + $0xc] sm:$0xf]
        %v296 = vld [vmem:[%s278] sm:$0x1]
        %v298 = vlaneseq
        %v299 = vshrl.u32 %v298, 7
        %v300 = vsub.s32 0, %v299
        %v301 = vrot.slane %v296, %v300
        %v307 = vunpack.c.l.b16 %v292
        %v308 = vunpack.c.l.b16 %v293
        %v309 = vunpack.c.l.b16 %v294
        %v310 = vunpack.c.l.b16 %v295
        %v311 = vpack.c.b16 %v308, %v307
        %v312 = vpack.c.b16 %v310, %v309
        %vm315 = vcmask 261120
        %v317 = vsel %vm315, %v291, 0
        %319 = vmatprep.subr.bf16.mxu0 0
        %320 = vmatpush1.bf16.msra.mxu0 %v311
        %321 = vmatprep.subr.bf16.mxu0 0
        %322 = vmatpush1.bf16.msra.mxu0 %v312
        %323 = vmatprep.subr.bf16.mxu0 0
        %324 = vmatpush1.bf16.msra.mxu0 0
        %325 = vmatprep.subr.bf16.mxu0 0
        %326 = vmatpush1.bf16.msra.mxu0 0
        %327 = vmatprep.subr.bf16.mxu0 0
        %328 = vmatpush1.bf16.msra.mxu0 0
        %329 = vmatprep.subr.bf16.mxu0 0
        %330 = vmatpush1.bf16.msra.mxu0 0
        %331 = vmatprep.subr.bf16.mxu0 0
        %332 = vmatpush1.bf16.msra.mxu0 0
        %333 = vmatprep.subr.bf16.mxu0 0
        %334 = vmatpush1.bf16.msra.mxu0 0
        %335 = vmatprep.subr.bf16.mxu0 0
        %336 = vmatpush1.bf16.msra.mxu0 0
        %337 = vmatprep.subr.bf16.mxu0 0
        %338 = vmatpush1.bf16.msra.mxu0 0
        %339 = vmatprep.subr.bf16.mxu0 0
        %340 = vmatpush1.bf16.msra.mxu0 0
        %341 = vmatprep.subr.bf16.mxu0 0
        %342 = vmatpush1.bf16.msra.mxu0 0
        %343 = vmatprep.subr.bf16.mxu0 0
        %344 = vmatpush1.bf16.msra.mxu0 0
        %345 = vmatprep.subr.bf16.mxu0 0
        %346 = vmatpush1.bf16.msra.mxu0 0
        %347 = vmatprep.subr.bf16.mxu0 0
        %348 = vmatpush1.bf16.msra.mxu0 0
        %349 = vmatprep.subr.bf16.mxu0 0
        %350 = vmatpush1.bf16.msra.mxu0 0
        %351 = vmatprep.mubr.bf16.mxu0 0
        %352 = vmatmul.mubr.bf16.gmra.mrb[0].mxu0 %v317
        %v353 = vpop.f32.mrb[0].mxu0
        %v354 = vadd.f32 %v301, %v353
        %v355 = vpop.f32.mrb[0].mxu0
        %v356 = vpop.f32.mrb[0].mxu0
        %v357 = vpop.f32.mrb[0].mxu0
        %358 = vdwg.mxu0
        %v359 = vpack.c.bf16 %v354, %v354
        %361 = vrot.lane.b32.xlu0 %v359, 120
        %v362 = vpop.permute.xlu0 %361
        %vm363 = vcmask 64512
        %v365 = vsel %vm363, %v359, 0
        %v368 = vsel %vm363, %v362, 0
        %370 = vmatprep.subr.bf16.mxu0 0
        %371 = vmatpush1.bf16.xpose.msra.mxu0 %v368
        %372 = vmatprep.subr.bf16.mxu0 0
        %373 = vmatpush1.bf16.xpose.msra.mxu0 0
        %374 = vmatprep.subr.bf16.mxu0 0
        %375 = vmatpush1.bf16.xpose.msra.mxu0 0
        %376 = vmatprep.subr.bf16.mxu0 0
        %377 = vmatpush1.bf16.xpose.msra.mxu0 0
        %378 = vmatprep.subr.bf16.mxu0 0
        %379 = vmatpush1.bf16.xpose.msra.mxu0 0
        %380 = vmatprep.subr.bf16.mxu0 0
        %381 = vmatpush1.bf16.xpose.msra.mxu0 0
        %382 = vmatprep.subr.bf16.mxu0 0
        %383 = vmatpush1.bf16.xpose.msra.mxu0 0
        %384 = vmatprep.subr.bf16.mxu0 0
        %385 = vmatpush1.bf16.xpose.msra.mxu0 0
        %386 = vmatprep.subr.bf16.mxu0 0
        %387 = vmatpush1.bf16.xpose.msra.mxu0 0
        %388 = vmatprep.subr.bf16.mxu0 0
        %389 = vmatpush1.bf16.xpose.msra.mxu0 0
        %390 = vmatprep.subr.bf16.mxu0 0
        %391 = vmatpush1.bf16.xpose.msra.mxu0 0
        %392 = vmatprep.subr.bf16.mxu0 0
        %393 = vmatpush1.bf16.xpose.msra.mxu0 0
        %394 = vmatprep.subr.bf16.mxu0 0
        %395 = vmatpush1.bf16.xpose.msra.mxu0 0
        %396 = vmatprep.subr.bf16.mxu0 0
        %397 = vmatpush1.bf16.xpose.msra.mxu0 0
        %398 = vmatprep.subr.bf16.mxu0 0
        %399 = vmatpush1.bf16.xpose.msra.mxu0 0
        %400 = vmatprep.subr.bf16.mxu0 0
        %401 = vmatpush1.bf16.xpose.msra.mxu0 0
        %402 = vmatprep.mubr.bf16.mxu0 0
        %403 = vmatmul.mubr.bf16.gmra.mrb[0].mxu0 %v365
        %v404 = vpop.f32.mrb[0].mxu0
        %v405 = vadd.f32 0.0, %v404
        %v406 = vpop.f32.mrb[0].mxu0
        %v407 = vpop.f32.mrb[0].mxu0
        %v408 = vpop.f32.mrb[0].mxu0
        %409 = vdwg.mxu0
        %v410 = vmul.f32 %v405, 0.35355338
        %v411 = vlaneseq
        %v412 = vshrl.u32 %v411, 7
        %v413 = vlaneseq
        %v414 = vand.u32 %v413, 127
        %vm415 = vcmp.ge.s32.totalorder %v412, %v414
        %v416 = vsel %vm415, %v410, -1e+30
        %v417 = vsel %vm363, %v416, -inf
        %418 = vmax.xlane.f32.xlu0 %v417
        %v419 = vpop.xlane.xlu0 %418
        %v420 = vsub.f32 %v416, %v419
        %v421 = vmul.f32 %v420, 1.442695
        %v422 = vpow.pop %v421
        %v423 = vsel %vm363, %v422, 0.0
        %424 = vadd.xlane.f32.xlu0 %v423
        %v425 = vpop.xlane.xlu0 %424
        %v426 = vrcp.pop %v425
        %v427 = vmul.f32 %v422, %v426
        %v428 = vpack.c.bf16 %v427, %v427
        %429 = vrot.lane.b32.xlu0 %v359, 112
        %v430 = vpop.permute.xlu0 %429
        %v432 = vsel %vm363, %v428, 0
        %vm434 = vcmask 1043456
        %v436 = vsel %vm434, %v430, 0
        %438 = vmatprep.subr.bf16.mxu0 0
        %439 = vmatpush1.bf16.msra.mxu0 %v436
        %440 = vmatprep.subr.bf16.mxu0 0
        %441 = vmatpush1.bf16.msra.mxu0 0
        %442 = vmatprep.subr.bf16.mxu0 0
        %443 = vmatpush1.bf16.msra.mxu0 0
        %444 = vmatprep.subr.bf16.mxu0 0
        %445 = vmatpush1.bf16.msra.mxu0 0
        %446 = vmatprep.subr.bf16.mxu0 0
        %447 = vmatpush1.bf16.msra.mxu0 0
        %448 = vmatprep.subr.bf16.mxu0 0
        %449 = vmatpush1.bf16.msra.mxu0 0
        %450 = vmatprep.subr.bf16.mxu0 0
        %451 = vmatpush1.bf16.msra.mxu0 0
        %452 = vmatprep.subr.bf16.mxu0 0
        %453 = vmatpush1.bf16.msra.mxu0 0
        %454 = vmatprep.subr.bf16.mxu0 0
        %455 = vmatpush1.bf16.msra.mxu0 0
        %456 = vmatprep.subr.bf16.mxu0 0
        %457 = vmatpush1.bf16.msra.mxu0 0
        %458 = vmatprep.subr.bf16.mxu0 0
        %459 = vmatpush1.bf16.msra.mxu0 0
        %460 = vmatprep.subr.bf16.mxu0 0
        %461 = vmatpush1.bf16.msra.mxu0 0
        %462 = vmatprep.subr.bf16.mxu0 0
        %463 = vmatpush1.bf16.msra.mxu0 0
        %464 = vmatprep.subr.bf16.mxu0 0
        %465 = vmatpush1.bf16.msra.mxu0 0
        %466 = vmatprep.subr.bf16.mxu0 0
        %467 = vmatpush1.bf16.msra.mxu0 0
        %468 = vmatprep.subr.bf16.mxu0 0
        %469 = vmatpush1.bf16.msra.mxu0 0
        %470 = vmatprep.mubr.bf16.mxu0 0
        %471 = vmatmul.mubr.bf16.gmra.mrb[0].mxu0 %v432
        %v472 = vpop.f32.mrb[0].mxu0
        %v473 = vadd.f32 0.0, %v472
        %v474 = vpop.f32.mrb[0].mxu0
        %v475 = vpop.f32.mrb[0].mxu0
        %v476 = vpop.f32.mrb[0].mxu0
        %477 = vdwg.mxu0
        %v478 = vld [vmem:[#allocation2] sm:$0xff]
        %v479 = vpack.c.bf16 %v473, %v473
        %v480 = vld [vmem:[%s282] sm:$0xf]
        %v482 = vsel %vm363, %v479, 0
        %v485 = vsel %vm434, %v480, 0
        %487 = vmatprep.subr.bf16.mxu0 0
        %488 = vmatpush1.bf16.msra.mxu0 %v485
        %489 = vmatprep.subr.bf16.mxu0 0
        %490 = vmatpush1.bf16.msra.mxu0 0
        %491 = vmatprep.subr.bf16.mxu0 0
        %492 = vmatpush1.bf16.msra.mxu0 0
        %493 = vmatprep.subr.bf16.mxu0 0
        %494 = vmatpush1.bf16.msra.mxu0 0
        %495 = vmatprep.subr.bf16.mxu0 0
        %496 = vmatpush1.bf16.msra.mxu0 0
        %497 = vmatprep.subr.bf16.mxu0 0
        %498 = vmatpush1.bf16.msra.mxu0 0
        %499 = vmatprep.subr.bf16.mxu0 0
        %500 = vmatpush1.bf16.msra.mxu0 0
        %501 = vmatprep.subr.bf16.mxu0 0
        %502 = vmatpush1.bf16.msra.mxu0 0
        %503 = vmatprep.subr.bf16.mxu0 0
        %504 = vmatpush1.bf16.msra.mxu0 0
        %505 = vmatprep.subr.bf16.mxu0 0
        %506 = vmatpush1.bf16.msra.mxu0 0
        %507 = vmatprep.subr.bf16.mxu0 0
        %508 = vmatpush1.bf16.msra.mxu0 0
        %509 = vmatprep.subr.bf16.mxu0 0
        %510 = vmatpush1.bf16.msra.mxu0 0
        %511 = vmatprep.subr.bf16.mxu0 0
        %512 = vmatpush1.bf16.msra.mxu0 0
        %513 = vmatprep.subr.bf16.mxu0 0
        %514 = vmatpush1.bf16.msra.mxu0 0
        %515 = vmatprep.subr.bf16.mxu0 0
        %516 = vmatpush1.bf16.msra.mxu0 0
        %517 = vmatprep.subr.bf16.mxu0 0
        %518 = vmatpush1.bf16.msra.mxu0 0
        %519 = vmatprep.mubr.bf16.mxu0 0
        %520 = vmatmul.mubr.bf16.gmra.mrb[0].mxu0 %v482
        %v521 = vpop.f32.mrb[0].mxu0
        %v522 = vadd.f32 0.0, %v521
        %v523 = vpop.f32.mrb[0].mxu0
        %v524 = vpop.f32.mrb[0].mxu0
        %v525 = vpop.f32.mrb[0].mxu0
        %526 = vdwg.mxu0
        %v527 = vadd.f32 %v478, %v522
        %528 = vst.msk [vmem:[#allocation2] sm:$0xff] %vm315, %v527
        %p529 = scmp.eq.s32.totalorder %s24, 3
        // Predicated region
        $region45: #{tpu_custom_call.1} parent=39 // pred_check
          %p530 = pneg %p529
        $region46: #{tpu_custom_call.1} parent=39 // pred_check_branch
          %532 = sbr.rel (%p530) target = $region48
        $region47: #{tpu_custom_call.1} parent=39 // pred_region
          %v533 = vld [vmem:[#allocation2] sm:$0xff]
          %v534 = vld [vmem:[%s4] sm:$0x1]
          %v536 = vlaneseq
          %v537 = vshrl.u32 %v536, 7
          %v538 = vsub.s32 0, %v537
          %v539 = vrot.slane %v534, %v538
          %v541 = vadd.f32 %v533, %v539
          %542 = vst.msk [vmem:[%s266] sm:$0xff] %vm315, %v541
        $region48: #{tpu_custom_call.1} parent=39 // pred_fallthru
          _
        %s543 = sand.u32 %s164, 1
        %s544 = scalar_lea.sflag [#allocation4], %s543
        %s545 = sand.u32 %s164, 1
        %s546 = smul.addr %s545, 8
        %s547 = scalar_lea.vmem [#allocation3], %s546
        // Predicated region
        $region49: #{tpu_custom_call.1} parent=39 // pred_check
          %p548 = pneg %p174
        $region50: #{tpu_custom_call.1} parent=39 // pred_check_branch
          %550 = sbr.rel (%p548) target = $region52
        $region51: #{tpu_custom_call.1} parent=39 // pred_region
          %s552 = ssub.s32 128, 128
          %553 = vsyncadd %s544, %s552
          %s554 = smul.addr %s23, 128
          %s555 = scalar_lea.hbm %s5, %s554
          %s557 = sshll.u32 %s547, 4
          %s558 = int_to_ptr.vmem [resolvable:$true] %s557
          %560 = dma.vmem_to_hbm [thread:$0]  %s558, 128, %s555, %s544
        $region52: #{tpu_custom_call.1} parent=39 // pred_fallthru
          _
      $region40: #{tpu_custom_call.1} parent=5 // pred_fallthru
        _
      %p561 = scmp.le.s32.totalorder 2, %s14
      // Predicated region
      $region53: #{tpu_custom_call.1} parent=5 // pred_check
        %p562 = pneg %p561
      $region54: #{tpu_custom_call.1} parent=5 // pred_check_branch
        %564 = sbr.rel (%p562) target = $region56
      $region55: #{tpu_custom_call.1} parent=5 // pred_region
        %s565 = ssub.s32 %s14, 2
        // Predicated region
        $region57: #{tpu_custom_call.1} parent=55 // pred_check
          %p566 = pneg %p180
        $region58: #{tpu_custom_call.1} parent=55 // pred_check_branch
          %568 = sbr.rel (%p566) target = $region60
        $region59: #{tpu_custom_call.1} parent=55 // pred_region
          %s569 = sand.u32 %s165, 1
          %s570 = scalar_lea.sflag [#allocation4], %s569
          %s571 = sand.u32 %s165, 1
          %s572 = smul.addr %s571, 8
          %s573 = scalar_lea.vmem [#allocation3], %s572
          %574 = dma.done %s570, 128
        $region60: #{tpu_custom_call.1} parent=55 // pred_fallthru
          _
      $region56: #{tpu_custom_call.1} parent=5 // pred_fallthru
        _
    $region6: #{tpu_custom_call.1} parent=1 // loop_footer
      %s18 = sadd.s32 1, %s14
    $region7: #{tpu_custom_call.1} parent=1 // loop_footer_branch
      %13 = sbr.rel target = $region3
    $region8: #{tpu_custom_call.1} parent=1 // loop_exit
      _
    %575 = vsyncpa [#allocation4], 1
    %s576 = scalar_lea.sflag [#allocation4], 1
    %577 = vsyncpa %s576, 1

</llo_original>
